<compile_context>
chip_gen: v7x
topology: tpu7x:2x2x1
jax: 0.10.0
libtpu: 0.0.40
codegen_flags: <defaults>
</compile_context>

<pallas_src>
import functools

import jax
import jax.numpy as jnp
from jax import lax
from jax.experimental import pallas as pl
from jax.experimental.pallas import tpu as pltpu

FEATURE_CHANNELS = 256
MAX_POINTS = 1024
MIN_POINTS = 30

LANE = 128
MAX_TILE_BYTES = 6 * 1024 * 1024   # per-buffer cap for the feature-map tile


def _predictor_kernel(x_ref, w1_ref, b1_ref, w2_ref, b2_ref, w3_ref, b3_ref,
                      out_ref, acc_ref, *, hw, tile_hw, inv_hw, max_points,
                      ragged):
    # Grid: (B, HW_tiles).  axis 0 = batch row ("parallel"),
    #                       axis 1 = spatial reduction ("arbitrary", last).
    k = pl.program_id(1)
    last = pl.num_programs(1) - 1
    n_sub = tile_hw // LANE

    @pl.when(k == 0)
    def _init():
        acc_ref[...] = jnp.zeros_like(acc_ref)

    def accumulate(mask_tail):
        x = x_ref[...]                                   # (1, C, tile_hw)
        if mask_tail:
            # Lanes at/after (hw - k*tile_hw) are past the true array end
            # (undefined data in the partial block) -> zero them.
            rem = hw - k * tile_hw
            lane = lax.broadcasted_iota(jnp.int32, x.shape, dimension=2)
            x = jnp.where(lane < rem, x, 0.0)
        # Lane-tile-aligned static slices + VALU adds only (no XLU in the
        # hot loop); result stays in the (sublane=C, lane=128) layout.
        partial = x[:, :, 0:LANE]
        for s in range(1, n_sub):
            partial = partial + x[:, :, s * LANE:(s + 1) * LANE]
        acc_ref[...] += partial                          # (1, C, 128)

    if ragged:
        @pl.when(k != last)
        def _steady():
            accumulate(False)

        @pl.when(k == last)
        def _tail():
            accumulate(True)
    else:
        accumulate(False)

    @pl.when(k == last)
    def _finalize():
        # Single cross-lane reduce per batch row (off the hot loop).
        pooled = jnp.sum(acc_ref[...], axis=-1) * inv_hw             # (1, C)

        # Linear(C, 128) + ReLU
        h1 = jnp.dot(pooled, w1_ref[...],
                     preferred_element_type=jnp.float32) + b1_ref[...]
        h1 = jnp.maximum(h1, 0.0)                                    # (1, 128)

        # Linear(128, 64) + ReLU
        h2 = jnp.dot(h1, w2_ref[...],
                     preferred_element_type=jnp.float32) + b2_ref[...]
        h2 = jnp.maximum(h2, 0.0)                                    # (1, 64)

        # Linear(64, 1): VPU broadcast-multiply + lane reduce (avoids an N=1
        # MXU matmul).  w3_ref is (1, 64), b3_ref is (1, 1).
        logits = jnp.sum(h2 * w3_ref[...], axis=-1, keepdims=True) + b3_ref[...]
        ratio = jax.nn.sigmoid(logits)                               # (1, 1)

        pts = jnp.round(ratio * float(max_points))
        pts = jnp.maximum(pts, float(MIN_POINTS))
        out_ref[...] = pts.reshape(out_ref.shape).astype(jnp.int32)


def points_number_predictor(features, params, *, max_points=MAX_POINTS,
                            tile_hw=None):
    """features: (B, C, H, W) float32 NCHW.  Returns (B, 1) int32."""
    B, C, H, W = features.shape
    hw = H * W
    w1, b1, w2, b2, w3, b3 = params

    # Lane tile for the spatial reduction: multiple of 128, <= ~6 MiB/buffer.
    if tile_hw is None:
        cap = max(LANE, (MAX_TILE_BYTES // (C * 4)) // LANE * LANE)
        tile_hw = min(cap, pl.cdiv(hw, LANE) * LANE)
    assert tile_hw % LANE == 0
    n_hw_tiles = pl.cdiv(hw, tile_hw)
    ragged = (hw % tile_hw) != 0

    # No jnp.pad: the ragged tail block is masked inside the kernel, saving a
    # full extra HBM write+read of the feature map when HW isn't tile-aligned.
    x = features.reshape(B, C, hw)

    kernel = functools.partial(_predictor_kernel,
                               hw=hw,
                               tile_hw=tile_hw,
                               inv_hw=1.0 / float(hw),
                               max_points=max_points,
                               ragged=ragged)

    const2 = lambda b, k: (0, 0)   # weights/biases: resident, DMA'd once
    grid_spec = pltpu.PrefetchScalarGridSpec(
        num_scalar_prefetch=0,
        grid=(B, n_hw_tiles),
        in_specs=[
            pl.BlockSpec((1, C, tile_hw), lambda b, k: (b, 0, k)),  # features
            pl.BlockSpec((C, 128), const2),                         # w1
            pl.BlockSpec((1, 128), const2),                         # b1
            pl.BlockSpec((128, 64), const2),                        # w2
            pl.BlockSpec((1, 64), const2),                          # b2
            pl.BlockSpec((1, 64), const2),                          # w3 (row)
            pl.BlockSpec((1, 1), const2),                           # b3
        ],
        out_specs=pl.BlockSpec((1, 1, 1), lambda b, k: (b, 0, 0)),
        scratch_shapes=[pltpu.VMEM((1, C, LANE), jnp.float32)],     # pooled sum
    )

    param_bytes = sum(int(p.size) * 4 for p in params)
    cost = pl.CostEstimate(
        flops=2 * B * (C * hw + C * 128 + 128 * 64 + 64),
        transcendentals=B,                                  # sigmoid
        bytes_accessed=B * C * hw * 4 + param_bytes + B * 4,
    )

    block_bytes = C * tile_hw * 4
    acc_bytes = C * LANE * 4
    vmem_limit = max(16 * 1024 * 1024,
                     2 * block_bytes + 2 * param_bytes + acc_bytes + (4 << 20))
    vmem_limit = min(vmem_limit, 48 * 1024 * 1024)   # stay inside v7x's 64 MiB

    out = pl.pallas_call(
        kernel,
        out_shape=jax.ShapeDtypeStruct((B, 1, 1), jnp.int32),
        grid_spec=grid_spec,
        compiler_params=pltpu.CompilerParams(
            dimension_semantics=("parallel", "arbitrary"),
            vmem_limit_bytes=int(vmem_limit)),
        cost_estimate=cost,
    )(x, w1, b1, w2, b2, w3, b3)
    return out.reshape(B, 1)


def init_params(key, feature_channels=FEATURE_CHANNELS):
    """Deterministic synthetic parameters. Weights stored as (in, out)."""
    k1, k2, k3, k4, k5, k6 = jax.random.split(key, 6)
    w1 = jax.random.normal(k1, (feature_channels, 128), jnp.float32) * 0.05
    b1 = jax.random.normal(k2, (1, 128), jnp.float32) * 0.05
    w2 = jax.random.normal(k3, (128, 64), jnp.float32) * 0.05
    b2 = jax.random.normal(k4, (1, 64), jnp.float32) * 0.05
    w3 = jax.random.normal(k5, (1, 64), jnp.float32) * 0.05   # (out=1, in=64) row
    b3 = jax.random.normal(k6, (1, 1), jnp.float32) * 0.05
    return (w1, b1, w2, b2, w3, b3)


def reference(features, params):
    """Plain-JAX reference of the PyTorch forward, for sanity checking."""
    w1, b1, w2, b2, w3, b3 = params
    pooled = jnp.mean(features, axis=(2, 3))                     # (B, C)
    h1 = jnp.maximum(pooled @ w1 + b1, 0.0)
    h2 = jnp.maximum(h1 @ w2 + b2, 0.0)
    logits = h2 @ w3.T + b3
    ratio = jax.nn.sigmoid(logits)
    pts = jnp.maximum(jnp.round(ratio * MAX_POINTS), MIN_POINTS)
    return pts.astype(jnp.int32)


if __name__ == "__main__":
    key = jax.random.PRNGKey(0)
    k_feat, k_par = jax.random.split(key)

    # Small shapes; HW = 192 with tile_hw=128 exercises both the multi-step
    # accumulation path and the in-kernel ragged-tail masking (64 valid lanes
    # in the final block).
    B, C, H, W = 2, 64, 16, 12
    features = jax.random.normal(k_feat, (B, C, H, W), jnp.float32)
    params = init_params(k_par, feature_channels=C)

    out = points_number_predictor(features, params, tile_hw=128)
    out = jax.block_until_ready(out)

    ref = reference(features, params)
    assert out.shape == (B, 1), out.shape
    assert out.dtype == jnp.int32, out.dtype
    # Tiled f32 accumulation vs jnp.mean can differ by ~1e-6 of a point; the
    # rounded integers should agree, tolerate a 1-count rounding-edge flip.
    assert int(jnp.max(jnp.abs(out - ref))) <= 1, (out, ref)
    assert bool(jnp.all(out >= MIN_POINTS))

    # Also exercise the auto-tile (non-ragged single-tile) path.
    out2 = points_number_predictor(features, params)
    out2 = jax.block_until_ready(out2)
    assert int(jnp.max(jnp.abs(out2 - ref))) <= 1, (out2, ref)

    print("KERNEL_OK")
</pallas_src>

<mosaic_0001>
module attributes {stable_mosaic.version = 11 : i64} {
  func.func @_predictor_kernel(%arg0: i32, %arg1: i32, %arg2: memref<1x64x128xf32, #tpu.memory_space<vmem>>, %arg3: memref<64x128xf32, #tpu.memory_space<vmem>>, %arg4: memref<1x128xf32, #tpu.memory_space<vmem>>, %arg5: memref<128x64xf32, #tpu.memory_space<vmem>>, %arg6: memref<1x64xf32, #tpu.memory_space<vmem>>, %arg7: memref<1x64xf32, #tpu.memory_space<vmem>>, %arg8: memref<1x1xf32, #tpu.memory_space<vmem>>, %arg9: memref<1x1x1xi32, #tpu.memory_space<vmem>>, %arg10: memref<1x64x128xf32, #tpu.memory_space<vmem>>) attributes {dimension_semantics = [#tpu.dimension_semantics<parallel>, #tpu.dimension_semantics<arbitrary>], iteration_bounds = array<i64: 2, 2>, scalar_prefetch = 0 : i64, scratch_operands = 1 : i64, tpu.core_type = #tpu.core_type<tc>, window_params = [{transform_indices = @transform_0, window_bounds = array<i64: 1, 64, 128>}, {pipeline_mode = #tpu.pipeline_mode<synchronous>, transform_indices = @transform_1, window_bounds = array<i64: 64, 128>}, {pipeline_mode = #tpu.pipeline_mode<synchronous>, transform_indices = @transform_2, window_bounds = array<i64: 1, 128>}, {pipeline_mode = #tpu.pipeline_mode<synchronous>, transform_indices = @transform_3, window_bounds = array<i64: 128, 64>}, {pipeline_mode = #tpu.pipeline_mode<synchronous>, transform_indices = @transform_4, window_bounds = array<i64: 1, 64>}, {pipeline_mode = #tpu.pipeline_mode<synchronous>, transform_indices = @transform_5, window_bounds = array<i64: 1, 64>}, {pipeline_mode = #tpu.pipeline_mode<synchronous>, transform_indices = @transform_6, window_bounds = array<i64: 1, 1>}, {transform_indices = @transform_7, window_bounds = array<i64: 1, 1, 1>}]} {
    %c0_i32 = arith.constant 0 : i32
    %0 = arith.cmpi eq, %arg1, %c0_i32 : i32
    %1 = arith.extui %0 : i1 to i32
    %c0_i32_0 = arith.constant 0 : i32
    %2 = arith.cmpi ne, %1, %c0_i32_0 : i32
    scf.if %2 {
      %cst = arith.constant 0.000000e+00 : f32
      %12 = vector.broadcast %cst : f32 to vector<1x64x128xf32>
      %c0 = arith.constant 0 : index
      %c0_6 = arith.constant 0 : index
      %c0_7 = arith.constant 0 : index
      %13 = vector.load %arg10[%c0, %c0_6, %c0_7] : memref<1x64x128xf32, #tpu.memory_space<vmem>>, vector<1x64x128xf32>
      tpu.vector_store %arg10[%c0, %c0_6, %c0_7], %12 {strides = array<i32>} : memref<1x64x128xf32, #tpu.memory_space<vmem>>, vector<1x64x128xf32>,
    } else {
    }
    %c1_i32 = arith.constant 1 : i32
    %3 = arith.cmpi ne, %arg1, %c1_i32 : i32
    %4 = arith.extui %3 : i1 to i32
    %c0_i32_1 = arith.constant 0 : i32
    %5 = arith.cmpi ne, %4, %c0_i32_1 : i32
    scf.if %5 {
      %c0 = arith.constant 0 : index
      %c0_6 = arith.constant 0 : index
      %c0_7 = arith.constant 0 : index
      %12 = vector.load %arg2[%c0, %c0_6, %c0_7] : memref<1x64x128xf32, #tpu.memory_space<vmem>>, vector<1x64x128xf32>
      %c0_8 = arith.constant 0 : index
      %c0_9 = arith.constant 0 : index
      %c0_10 = arith.constant 0 : index
      %13 = vector.load %arg10[%c0_8, %c0_9, %c0_10] : memref<1x64x128xf32, #tpu.memory_space<vmem>>, vector<1x64x128xf32>
      %14 = arith.addf %13, %12 : vector<1x64x128xf32>
      %c0_11 = arith.constant 0 : index
      %c0_12 = arith.constant 0 : index
      %c0_13 = arith.constant 0 : index
      %15 = vector.load %arg10[%c0_11, %c0_12, %c0_13] : memref<1x64x128xf32, #tpu.memory_space<vmem>>, vector<1x64x128xf32>
      tpu.vector_store %arg10[%c0_11, %c0_12, %c0_13], %14 {strides = array<i32>} : memref<1x64x128xf32, #tpu.memory_space<vmem>>, vector<1x64x128xf32>,
    } else {
    }
    %c1_i32_2 = arith.constant 1 : i32
    %6 = arith.cmpi eq, %arg1, %c1_i32_2 : i32
    %7 = arith.extui %6 : i1 to i32
    %c0_i32_3 = arith.constant 0 : i32
    %8 = arith.cmpi ne, %7, %c0_i32_3 : i32
    scf.if %8 {
      %c0 = arith.constant 0 : index
      %c0_6 = arith.constant 0 : index
      %c0_7 = arith.constant 0 : index
      %12 = vector.load %arg2[%c0, %c0_6, %c0_7] : memref<1x64x128xf32, #tpu.memory_space<vmem>>, vector<1x64x128xf32>
      %c128_i32 = arith.constant 128 : i32
      %13 = arith.muli %arg1, %c128_i32 : i32
      %c192_i32 = arith.constant 192 : i32
      %14 = arith.subi %c192_i32, %13 : i32
      %15 = tpu.iota {dimensions = array<i32: 2>} : vector<1x64x128xi32>
      %16 = vector.broadcast %14 : i32 to vector<1x64x128xi32>
      %17 = arith.cmpi slt, %15, %16 : vector<1x64x128xi32>
      %cst = arith.constant 0.000000e+00 : f32
      %18 = vector.broadcast %cst : f32 to vector<1x64x128xf32>
      %19 = arith.select %17, %12, %18 : vector<1x64x128xi1>, vector<1x64x128xf32>
      %c0_8 = arith.constant 0 : index
      %c0_9 = arith.constant 0 : index
      %c0_10 = arith.constant 0 : index
      %20 = vector.load %arg10[%c0_8, %c0_9, %c0_10] : memref<1x64x128xf32, #tpu.memory_space<vmem>>, vector<1x64x128xf32>
      %21 = arith.addf %20, %19 : vector<1x64x128xf32>
      %c0_11 = arith.constant 0 : index
      %c0_12 = arith.constant 0 : index
      %c0_13 = arith.constant 0 : index
      %22 = vector.load %arg10[%c0_11, %c0_12, %c0_13] : memref<1x64x128xf32, #tpu.memory_space<vmem>>, vector<1x64x128xf32>
      tpu.vector_store %arg10[%c0_11, %c0_12, %c0_13], %21 {strides = array<i32>} : memref<1x64x128xf32, #tpu.memory_space<vmem>>, vector<1x64x128xf32>,
    } else {
    }
    %c1_i32_4 = arith.constant 1 : i32
    %9 = arith.cmpi eq, %arg1, %c1_i32_4 : i32
    %10 = arith.extui %9 : i1 to i32
    %c0_i32_5 = arith.constant 0 : i32
    %11 = arith.cmpi ne, %10, %c0_i32_5 : i32
    scf.if %11 {
      %c0 = arith.constant 0 : index
      %c0_6 = arith.constant 0 : index
      %c0_7 = arith.constant 0 : index
      %12 = vector.load %arg10[%c0, %c0_6, %c0_7] : memref<1x64x128xf32, #tpu.memory_space<vmem>>, vector<1x64x128xf32>
      %cst = arith.constant dense<0.000000e+00> : vector<1x64xf32>
      %13 = vector.multi_reduction <add>, %12, %cst [2] : vector<1x64x128xf32> to vector<1x64xf32>
      %cst_8 = arith.constant 0.00520833349 : f32
      %14 = vector.broadcast %cst_8 : f32 to vector<1x64xf32>
      %15 = arith.mulf %13, %14 : vector<1x64xf32>
      %c0_9 = arith.constant 0 : index
      %c0_10 = arith.constant 0 : index
      %16 = vector.load %arg3[%c0_9, %c0_10] : memref<64x128xf32, #tpu.memory_space<vmem>>, vector<64x128xf32>
      %cst_11 = arith.constant dense<0.000000e+00> : vector<1x128xf32>
      %17 = tpu.matmul %15, %16, %cst_11 {dimension_numbers = #tpu.dot_dimension_numbers<[1], [0], [0], [1], [0, 0, 1, 1], [], []>} : vector<1x64xf32>, vector<64x128xf32>, vector<1x128xf32> -> vector<1x128xf32>
      %c0_12 = arith.constant 0 : index
      %c0_13 = arith.constant 0 : index
      %18 = vector.load %arg4[%c0_12, %c0_13] : memref<1x128xf32, #tpu.memory_space<vmem>>, vector<1x128xf32>
      %19 = arith.addf %17, %18 : vector<1x128xf32>
      %cst_14 = arith.constant 0.000000e+00 : f32
      %20 = vector.broadcast %cst_14 : f32 to vector<1x128xf32>
      %21 = arith.maximumf %19, %20 : vector<1x128xf32>
      %c0_15 = arith.constant 0 : index
      %c0_16 = arith.constant 0 : index
      %22 = vector.load %arg5[%c0_15, %c0_16] : memref<128x64xf32, #tpu.memory_space<vmem>>, vector<128x64xf32>
      %cst_17 = arith.constant dense<0.000000e+00> : vector<1x64xf32>
      %23 = tpu.matmul %21, %22, %cst_17 {dimension_numbers = #tpu.dot_dimension_numbers<[1], [0], [0], [1], [0, 0, 1, 1], [], []>} : vector<1x128xf32>, vector<128x64xf32>, vector<1x64xf32> -> vector<1x64xf32>
      %c0_18 = arith.constant 0 : index
      %c0_19 = arith.constant 0 : index
      %24 = vector.load %arg6[%c0_18, %c0_19] : memref<1x64xf32, #tpu.memory_space<vmem>>, vector<1x64xf32>
      %25 = arith.addf %23, %24 : vector<1x64xf32>
      %cst_20 = arith.constant 0.000000e+00 : f32
      %26 = vector.broadcast %cst_20 : f32 to vector<1x64xf32>
      %27 = arith.maximumf %25, %26 : vector<1x64xf32>
      %c0_21 = arith.constant 0 : index
      %c0_22 = arith.constant 0 : index
      %28 = vector.load %arg7[%c0_21, %c0_22] : memref<1x64xf32, #tpu.memory_space<vmem>>, vector<1x64xf32>
      %29 = arith.mulf %27, %28 : vector<1x64xf32>
      %cst_23 = arith.constant dense<0.000000e+00> : vector<1xf32>
      %30 = vector.multi_reduction <add>, %29, %cst_23 [1] : vector<1x64xf32> to vector<1xf32>
      %31 = vector.shape_cast %30 : vector<1xf32> to vector<1x1xf32>
      %c0_24 = arith.constant 0 : index
      %c0_25 = arith.constant 0 : index
      %32 = vector.load %arg8[%c0_24, %c0_25] : memref<1x1xf32, #tpu.memory_space<vmem>>, vector<1x1xf32>
      %33 = arith.addf %31, %32 : vector<1x1xf32>
      %34 = arith.negf %33 : vector<1x1xf32>
      %35 = math.exp %34 : vector<1x1xf32>
      %cst_26 = arith.constant 1.000000e+00 : f32
      %36 = vector.broadcast %cst_26 : f32 to vector<1x1xf32>
      %37 = arith.addf %36, %35 : vector<1x1xf32>
      %38 = arith.divf %36, %37 : vector<1x1xf32>
      %cst_27 = arith.constant 1.024000e+03 : f32
      %39 = vector.broadcast %cst_27 : f32 to vector<1x1xf32>
      %40 = arith.mulf %38, %39 : vector<1x1xf32>
      %41 = math.roundeven %40 : vector<1x1xf32>
      %cst_28 = arith.constant 3.000000e+01 : f32
      %42 = vector.broadcast %cst_28 : f32 to vector<1x1xf32>
      %43 = arith.maximumf %41, %42 : vector<1x1xf32>
      %44 = vector.shape_cast %43 : vector<1x1xf32> to vector<1x1x1xf32>
      %45 = arith.fptosi %44 : vector<1x1x1xf32> to vector<1x1x1xi32>
      %c0_29 = arith.constant 0 : index
      %c0_30 = arith.constant 0 : index
      %c0_31 = arith.constant 0 : index
      %46 = vector.load %arg9[%c0_29, %c0_30, %c0_31] : memref<1x1x1xi32, #tpu.memory_space<vmem>>, vector<1x1x1xi32>
      tpu.vector_store %arg9[%c0_29, %c0_30, %c0_31], %45 {strides = array<i32>} : memref<1x1x1xi32, #tpu.memory_space<vmem>>, vector<1x1x1xi32>,
    } else {
    }
    return
  }
  func.func @transform_0(%arg0: i32, %arg1: i32) -> (i32, i32, i32) {
    %c0_i32 = arith.constant 0 : i32
    %c0_i32_0 = arith.constant 0 : i32
    return %arg0, %c0_i32, %arg1 : i32, i32, i32
  }
  func.func @transform_1(%arg0: i32, %arg1: i32) -> (i32, i32) {
    %c0_i32 = arith.constant 0 : i32
    %c0_i32_0 = arith.constant 0 : i32
    %c0_i32_1 = arith.constant 0 : i32
    return %c0_i32, %c0_i32_0 : i32, i32
  }
  func.func @transform_2(%arg0: i32, %arg1: i32) -> (i32, i32) {
    %c0_i32 = arith.constant 0 : i32
    %c0_i32_0 = arith.constant 0 : i32
    %c0_i32_1 = arith.constant 0 : i32
    return %c0_i32, %c0_i32_0 : i32, i32
  }
  func.func @transform_3(%arg0: i32, %arg1: i32) -> (i32, i32) {
    %c0_i32 = arith.constant 0 : i32
    %c0_i32_0 = arith.constant 0 : i32
    %c0_i32_1 = arith.constant 0 : i32
    return %c0_i32, %c0_i32_0 : i32, i32
  }
  func.func @transform_4(%arg0: i32, %arg1: i32) -> (i32, i32) {
    %c0_i32 = arith.constant 0 : i32
    %c0_i32_0 = arith.constant 0 : i32
    %c0_i32_1 = arith.constant 0 : i32
    return %c0_i32, %c0_i32_0 : i32, i32
  }
  func.func @transform_5(%arg0: i32, %arg1: i32) -> (i32, i32) {
    %c0_i32 = arith.constant 0 : i32
    %c0_i32_0 = arith.constant 0 : i32
    %c0_i32_1 = arith.constant 0 : i32
    return %c0_i32, %c0_i32_0 : i32, i32
  }
  func.func @transform_6(%arg0: i32, %arg1: i32) -> (i32, i32) {
    %c0_i32 = arith.constant 0 : i32
    %c0_i32_0 = arith.constant 0 : i32
    %c0_i32_1 = arith.constant 0 : i32
    return %c0_i32, %c0_i32_0 : i32, i32
  }
  func.func @transform_7(%arg0: i32, %arg1: i32) -> (i32, i32, i32) {
    %c0_i32 = arith.constant 0 : i32
    %c0_i32_0 = arith.constant 0 : i32
    %c0_i32_1 = arith.constant 0 : i32
    return %arg0, %c0_i32, %c0_i32_0 : i32, i32, i32
  }
}

</mosaic_0001>

<llo_original>
// kernel: tpu_custom_call.1
$region0: #{tpu_custom_call.1}
  #allocation0 [shape = 'u32[]', space=smem, size = 0x4, offset = 0x4, fixed_abs, tag = 'smem constant byte address 0x4 - core index']
  #allocation1 [shape = 'u32[144,128]{1,0:T(1,128)}', space=vmem, size = 0x12000, scoped, tag = 'internal scratch']
  #allocation2 [shape = 'f32[1,64,128]{2,1,0:T(8,128)}', space=vmem, size = 0x8000, scoped, tag = 'scratch operand']
  #allocation3 [shape = 'f32[1,1]{1,0:T(1,128)S(1)}', space=vmem, size = 0x200, scoped, tag = 'scoped memory for tpu_custom_call.1']
  %s0 = inlined_call_operand.hbm [shape: f32[2,64,192], index: 0, kind: input, shape index: {}]
  %s1 = inlined_call_operand.vmem [shape: f32[64,128], index: 1, kind: input, shape index: {}]
  %s2 = inlined_call_operand.vmem [shape: f32[1,128], index: 2, kind: input, shape index: {}]
  %s3 = inlined_call_operand.vmem [shape: f32[128,64], index: 3, kind: input, shape index: {}]
  %s4 = inlined_call_operand.vmem [shape: f32[1,64], index: 4, kind: input, shape index: {}]
  %s5 = inlined_call_operand.vmem [shape: f32[1,64], index: 5, kind: input, shape index: {}]
  %s6 = inlined_call_operand.<no memory space> [shape: f32[1,1], index: 6, kind: input, shape index: {}]
  %s7 = inlined_call_operand.vmem [shape: s32[2,1,1], index: 7, kind: output, shape index: {}]
  %s8 = sld [smem:[#allocation0]]
  $region77: #{tpu_custom_call.1} parent=0
    _
  %s10 = ssub.s32 1, %s8
  %s11 = scalar_select 0, %s10, %s8
  %v12 = vstv %s6
  %13 = vst [vmem:[#allocation3] sm:$0x1] %v12
  $region1: #{tpu_custom_call.1} parent=0
    #allocation4 [shape = 'u8[65536]{0}', space=vmem, size = 0x10000, scoped, tag = 'input window, operand 0']
    #allocation5 [shape = 's32[2]{0}', space=sflag, size = 0x8, scoped, tag = 'scoped memory for tpu_custom_call.1']
    %14 = vsyncpa [#allocation5], 0
    %s15 = scalar_lea.sflag [#allocation5], 1
    %16 = vsyncpa %s15, 0
    loop: start=0, step=1, limit=6
    $region2: #{tpu_custom_call.1} parent=1 // loop_pre_header
      _
    $region3: #{tpu_custom_call.1} parent=1 // loop_header
      %s18 = sphi 0, %s22
      %p19 = scmp.ge.s32.totalorder %s18, 6
      %s25 = sphi 0, %s37
      %s26 = sphi 0, %s33
      %s27 = sphi 0, %s25
      %s28 = sphi 0, %s26
      %s29 = sphi 0, %s27
      %s30 = sphi 0, %s28
      %s42 = sphi 0, %s44
      %s45 = sphi 0, %s42
      %s46 = sphi 0, %s45
      %s62 = sphi 0, %s46
      %s66 = sphi 0, %s66
      %s68 = sphi 0, %s66
      %s69 = sphi 0, %s68
      %s83 = sphi 0, %s69
      %s87 = sphi 0, %s87
      %s89 = sphi 0, %s87
      %s90 = sphi 0, %s89
      %s104 = sphi 0, %s90
      %s108 = sphi 0, %s108
      %s110 = sphi 0, %s108
      %s111 = sphi 0, %s110
      %s125 = sphi 0, %s111
      %s129 = sphi 0, %s129
      %s131 = sphi 0, %s129
      %s132 = sphi 0, %s131
      %s146 = sphi 0, %s132
      %s150 = sphi 0, %s150
      %s152 = sphi 0, %s150
      %s153 = sphi 0, %s152
      %s167 = sphi 0, %s153
      %s171 = sphi 0, %s171
      %s173 = sphi 0, %s171
      %s174 = sphi 0, %s173
      %s188 = sphi 0, %s174
      %s194 = sphi 0, %s196
      %s197 = sphi 0, %s194
      %s198 = sphi 0, %s197
      %s214 = sphi 0, %s198
    $region4: #{tpu_custom_call.1} parent=1 // loop_header_branch
      %21 = sbr.rel (%p19) target = $region8
    $region5: #{tpu_custom_call.1} parent=1 // loop_body
      %s23 = ssub.s32 %s18, 1
      %s24 = ssub.s32 %s18, 2
      %s31 = sadd.s32 1, %s26
      %p32 = scmp.ge.s32.totalorder %s31, 2
      %s33 = scalar_select %p32, 0, %s31
      %s34 = sadd.s32 1, %s25
      %s35 = scalar_select %p32, %s34, %s25
      %p36 = scmp.ge.s32.totalorder %s35, 2
      %s37 = scalar_select %p36, 0, %s35
      %s38 = ssub.s32 %s25, %s37
      %s39 = ssub.s32 %s26, %s33
      %s40 = sor.u32 %s38, %s39
      %p41 = scmp.eq.s32.totalorder %s40, 0
      %s43 = sadd.s32 %s42, 1
      %s44 = scalar_select %p41, %s42, %s43
      %p47 = pneg %p41
      %p48 = scmp.eq.s32.totalorder %s18, 3
      %p49 = por %p47, %p48
      %p50 = scmp.ne.s32.totalorder %s42, %s45
      %p51 = scmp.eq.s32.totalorder %s18, 0
      %p52 = por %p50, %p51
      %p53 = scmp.ne.s32.totalorder %s42, %s45
      %p54 = scmp.eq.s32.totalorder %s23, 3
      %p55 = por %p53, %p54
      %p56 = scmp.ne.s32.totalorder %s45, %s46
      %p57 = scmp.eq.s32.totalorder %s23, 0
      %p58 = por %p56, %p57
      %p59 = scmp.ne.s32.totalorder %s45, %s46
      %p60 = scmp.eq.s32.totalorder %s24, 3
      %p61 = por %p59, %p60
      %p63 = scmp.ne.s32.totalorder %s46, %s62
      %p64 = scmp.eq.s32.totalorder %s24, 0
      %p65 = por %p63, %p64
      %s67 = sadd.s32 %s66, 1
      %p70 = scmp.eq.s32.totalorder %s18, 3
      %p71 = scmp.ne.s32.totalorder %s66, %s68
      %p72 = scmp.eq.s32.totalorder %s18, 0
      %p73 = por %p71, %p72
      %p74 = scmp.ne.s32.totalorder %s66, %s68
      %p75 = scmp.eq.s32.totalorder %s23, 3
      %p76 = por %p74, %p75
      %p77 = scmp.ne.s32.totalorder %s68, %s69
      %p78 = scmp.eq.s32.totalorder %s23, 0
      %p79 = por %p77, %p78
      %p80 = scmp.ne.s32.totalorder %s68, %s69
      %p81 = scmp.eq.s32.totalorder %s24, 3
      %p82 = por %p80, %p81
      %p84 = scmp.ne.s32.totalorder %s69, %s83
      %p85 = scmp.eq.s32.totalorder %s24, 0
      %p86 = por %p84, %p85
      %s88 = sadd.s32 %s87, 1
      %p91 = scmp.eq.s32.totalorder %s18, 3
      %p92 = scmp.ne.s32.totalorder %s87, %s89
      %p93 = scmp.eq.s32.totalorder %s18, 0
      %p94 = por %p92, %p93
      %p95 = scmp.ne.s32.totalorder %s87, %s89
      %p96 = scmp.eq.s32.totalorder %s23, 3
      %p97 = por %p95, %p96
      %p98 = scmp.ne.s32.totalorder %s89, %s90
      %p99 = scmp.eq.s32.totalorder %s23, 0
      %p100 = por %p98, %p99
      %p101 = scmp.ne.s32.totalorder %s89, %s90
      %p102 = scmp.eq.s32.totalorder %s24, 3
      %p103 = por %p101, %p102
      %p105 = scmp.ne.s32.totalorder %s90, %s104
      %p106 = scmp.eq.s32.totalorder %s24, 0
      %p107 = por %p105, %p106
      %s109 = sadd.s32 %s108, 1
      %p112 = scmp.eq.s32.totalorder %s18, 3
      %p113 = scmp.ne.s32.totalorder %s108, %s110
      %p114 = scmp.eq.s32.totalorder %s18, 0
      %p115 = por %p113, %p114
      %p116 = scmp.ne.s32.totalorder %s108, %s110
      %p117 = scmp.eq.s32.totalorder %s23, 3
      %p118 = por %p116, %p117
      %p119 = scmp.ne.s32.totalorder %s110, %s111
      %p120 = scmp.eq.s32.totalorder %s23, 0
      %p121 = por %p119, %p120
      %p122 = scmp.ne.s32.totalorder %s110, %s111
      %p123 = scmp.eq.s32.totalorder %s24, 3
      %p124 = por %p122, %p123
      %p126 = scmp.ne.s32.totalorder %s111, %s125
      %p127 = scmp.eq.s32.totalorder %s24, 0
      %p128 = por %p126, %p127
      %s130 = sadd.s32 %s129, 1
      %p133 = scmp.eq.s32.totalorder %s18, 3
      %p134 = scmp.ne.s32.totalorder %s129, %s131
      %p135 = scmp.eq.s32.totalorder %s18, 0
      %p136 = por %p134, %p135
      %p137 = scmp.ne.s32.totalorder %s129, %s131
      %p138 = scmp.eq.s32.totalorder %s23, 3
      %p139 = por %p137, %p138
      %p140 = scmp.ne.s32.totalorder %s131, %s132
      %p141 = scmp.eq.s32.totalorder %s23, 0
      %p142 = por %p140, %p141
      %p143 = scmp.ne.s32.totalorder %s131, %s132
      %p144 = scmp.eq.s32.totalorder %s24, 3
      %p145 = por %p143, %p144
      %p147 = scmp.ne.s32.totalorder %s132, %s146
      %p148 = scmp.eq.s32.totalorder %s24, 0
      %p149 = por %p147, %p148
      %s151 = sadd.s32 %s150, 1
      %p154 = scmp.eq.s32.totalorder %s18, 3
      %p155 = scmp.ne.s32.totalorder %s150, %s152
      %p156 = scmp.eq.s32.totalorder %s18, 0
      %p157 = por %p155, %p156
      %p158 = scmp.ne.s32.totalorder %s150, %s152
      %p159 = scmp.eq.s32.totalorder %s23, 3
      %p160 = por %p158, %p159
      %p161 = scmp.ne.s32.totalorder %s152, %s153
      %p162 = scmp.eq.s32.totalorder %s23, 0
      %p163 = por %p161, %p162
      %p164 = scmp.ne.s32.totalorder %s152, %s153
      %p165 = scmp.eq.s32.totalorder %s24, 3
      %p166 = por %p164, %p165
      %p168 = scmp.ne.s32.totalorder %s153, %s167
      %p169 = scmp.eq.s32.totalorder %s24, 0
      %p170 = por %p168, %p169
      %s172 = sadd.s32 %s171, 1
      %p175 = scmp.eq.s32.totalorder %s18, 3
      %p176 = scmp.ne.s32.totalorder %s171, %s173
      %p177 = scmp.eq.s32.totalorder %s18, 0
      %p178 = por %p176, %p177
      %p179 = scmp.ne.s32.totalorder %s171, %s173
      %p180 = scmp.eq.s32.totalorder %s23, 3
      %p181 = por %p179, %p180
      %p182 = scmp.ne.s32.totalorder %s173, %s174
      %p183 = scmp.eq.s32.totalorder %s23, 0
      %p184 = por %p182, %p183
      %p185 = scmp.ne.s32.totalorder %s173, %s174
      %p186 = scmp.eq.s32.totalorder %s24, 3
      %p187 = por %p185, %p186
      %p189 = scmp.ne.s32.totalorder %s174, %s188
      %p190 = scmp.eq.s32.totalorder %s24, 0
      %p191 = por %p189, %p190
      %s192 = ssub.s32 %s25, %s37
      %p193 = scmp.eq.s32.totalorder %s192, 0
      %s195 = sadd.s32 %s194, 1
      %s196 = scalar_select %p193, %s194, %s195
      %p199 = pneg %p193
      %p200 = scmp.eq.s32.totalorder %s18, 3
      %p201 = por %p199, %p200
      %p202 = scmp.ne.s32.totalorder %s194, %s197
      %p203 = scmp.eq.s32.totalorder %s18, 0
      %p204 = por %p202, %p203
      %p205 = scmp.ne.s32.totalorder %s194, %s197
      %p206 = scmp.eq.s32.totalorder %s23, 3
      %p207 = por %p205, %p206
      %p208 = scmp.ne.s32.totalorder %s197, %s198
      %p209 = scmp.eq.s32.totalorder %s23, 0
      %p210 = por %p208, %p209
      %p211 = scmp.ne.s32.totalorder %s197, %s198
      %p212 = scmp.eq.s32.totalorder %s24, 3
      %p213 = por %p211, %p212
      %p215 = scmp.ne.s32.totalorder %s198, %s214
      %p216 = scmp.eq.s32.totalorder %s24, 0
      %p217 = por %p215, %p216
      %p218 = scmp.le.s32.totalorder 1, %s18
      %p219 = scmp.lt.s32.totalorder %s18, 5
      %p220 = pnand %p218, %p219
      %p221 = pneg %p220
      // Predicated region
      $region9: #{tpu_custom_call.1} parent=5 // pred_check
        _
      $region10: #{tpu_custom_call.1} parent=5 // pred_check_branch
        %223 = sbr.rel (%p220) target = $region12
      $region11: #{tpu_custom_call.1} parent=5 // pred_region
        %s224 = ssub.s32 %s18, 1
        // Predicated region
        $region13: #{tpu_custom_call.1} parent=11 // pred_check
          %p225 = pneg %p79
        $region14: #{tpu_custom_call.1} parent=11 // pred_check_branch
          %227 = sbr.rel (%p225) target = $region16
        $region15: #{tpu_custom_call.1} parent=11 // pred_region
          _
        $region16: #{tpu_custom_call.1} parent=11 // pred_fallthru
          _
        // Predicated region
        $region17: #{tpu_custom_call.1} parent=11 // pred_check
          %p228 = pneg %p100
        $region18: #{tpu_custom_call.1} parent=11 // pred_check_branch
          %230 = sbr.rel (%p228) target = $region20
        $region19: #{tpu_custom_call.1} parent=11 // pred_region
          _
        $region20: #{tpu_custom_call.1} parent=11 // pred_fallthru
          _
        // Predicated region
        $region21: #{tpu_custom_call.1} parent=11 // pred_check
          %p231 = pneg %p121
        $region22: #{tpu_custom_call.1} parent=11 // pred_check_branch
          %233 = sbr.rel (%p231) target = $region24
        $region23: #{tpu_custom_call.1} parent=11 // pred_region
          _
        $region24: #{tpu_custom_call.1} parent=11 // pred_fallthru
          _
        // Predicated region
        $region25: #{tpu_custom_call.1} parent=11 // pred_check
          %p234 = pneg %p142
        $region26: #{tpu_custom_call.1} parent=11 // pred_check_branch
          %236 = sbr.rel (%p234) target = $region28
        $region27: #{tpu_custom_call.1} parent=11 // pred_region
          _
        $region28: #{tpu_custom_call.1} parent=11 // pred_fallthru
          _
        // Predicated region
        $region29: #{tpu_custom_call.1} parent=11 // pred_check
          %p237 = pneg %p163
        $region30: #{tpu_custom_call.1} parent=11 // pred_check_branch
          %239 = sbr.rel (%p237) target = $region32
        $region31: #{tpu_custom_call.1} parent=11 // pred_region
          _
        $region32: #{tpu_custom_call.1} parent=11 // pred_fallthru
          _
        // Predicated region
        $region33: #{tpu_custom_call.1} parent=11 // pred_check
          %p240 = pneg %p184
        $region34: #{tpu_custom_call.1} parent=11 // pred_check_branch
          %242 = sbr.rel (%p240) target = $region36
        $region35: #{tpu_custom_call.1} parent=11 // pred_region
          _
        $region36: #{tpu_custom_call.1} parent=11 // pred_fallthru
          _
      $region12: #{tpu_custom_call.1} parent=5 // pred_fallthru
        _
      %p243 = scmp.lt.s32.totalorder %s18, 4
      // Predicated region
      $region37: #{tpu_custom_call.1} parent=5 // pred_check
        %p244 = pneg %p243
      $region38: #{tpu_custom_call.1} parent=5 // pred_check_branch
        %246 = sbr.rel (%p244) target = $region40
      $region39: #{tpu_custom_call.1} parent=5 // pred_region
        // Predicated region
        $region41: #{tpu_custom_call.1} parent=39 // pred_check
          %p247 = pneg %p52
        $region42: #{tpu_custom_call.1} parent=39 // pred_check_branch
          %249 = sbr.rel (%p247) target = $region44
        $region43: #{tpu_custom_call.1} parent=39 // pred_region
          %s250 = sand.u32 %s42, 1
          %s251 = scalar_lea.sflag [#allocation5], %s250
          %s252 = sand.u32 %s42, 1
          %s253 = smul.addr %s252, 64
          %s254 = scalar_lea.vmem [#allocation4], %s253
          %s256 = ssub.s32 1024, 1024
          %257 = vsyncadd %s251, %s256
          %s258 = smul.addr %s25, 16
          %s259 = sadd.s32 %s26, %s258
          %s260 = smul.addr %s259, 128
          %s261 = scalar_lea.hbm %s0, %s260
          %s262 = sshll.u32 %s254, 4
          %s263 = int_to_ptr.vmem [resolvable:$true] %s262
          %268 = dma.hbm_to_vmem [thread:$0]  %s261, 1024, %s263, %s251, 256, 128, 8
        $region44: #{tpu_custom_call.1} parent=39 // pred_fallthru
          _
      $region40: #{tpu_custom_call.1} parent=5 // pred_fallthru
        _
      %p269 = scmp.le.s32.totalorder 1, %s18
      %p270 = scmp.lt.s32.totalorder %s18, 5
      %p271 = pnand %p269, %p270
      %p272 = pneg %p271
      // Predicated region
      $region45: #{tpu_custom_call.1} parent=5 // pred_check
        _
      $region46: #{tpu_custom_call.1} parent=5 // pred_check_branch
        %274 = sbr.rel (%p271) target = $region48
      $region47: #{tpu_custom_call.1} parent=5 // pred_region
        %s275 = ssub.s32 %s18, 1
        %s276 = sand.u32 %s45, 1
        %s277 = scalar_lea.sflag [#allocation5], %s276
        %s278 = sand.u32 %s45, 1
        %s279 = smul.addr %s278, 64
        %s280 = scalar_lea.vmem [#allocation4], %s279
        // Predicated region
        $region49: #{tpu_custom_call.1} parent=47 // pred_check
          %p281 = pneg %p58
        $region50: #{tpu_custom_call.1} parent=47 // pred_check_branch
          %283 = sbr.rel (%p281) target = $region52
        $region51: #{tpu_custom_call.1} parent=47 // pred_region
          %284 = dma.done %s277, 1024
        $region52: #{tpu_custom_call.1} parent=47 // pred_fallthru
          _
        %s285 = sand.u32 %s45, 1
        %s286 = scalar_lea.sflag [#allocation5], %s285
        %s287 = sand.u32 %s45, 1
        %s288 = smul.addr %s287, 64
        %s289 = scalar_lea.vmem [#allocation4], %s288
        %p290 = pneg %p58
        %p291 = pneg %p55
        %p292 = pneg %p79
        %p293 = pneg %p76
        %p294 = pneg %p100
        %p295 = pneg %p97
        %p296 = pneg %p121
        %p297 = pneg %p118
        %p298 = pneg %p142
        %p299 = pneg %p139
        %p300 = pneg %p163
        %p301 = pneg %p160
        %p302 = pneg %p184
        %p303 = pneg %p181
        %p304 = pneg %p210
        %p305 = pneg %p207
        %p306 = scmp.lt.s32.totalorder %s27, 1
        %s307 = scalar_select %p306, %s27, 1
        %s308 = scalar_lea.vmem %s7, %s307
        %p309 = scmp.lt.s32.totalorder %s27, 1
        %s310 = scalar_select %p309, %s27, 1
        %s311 = scalar_lea.vmem %s7, %s310
        %p312 = scmp.eq.s32.totalorder %s28, 0
        // Predicated region
        $region53: #{tpu_custom_call.1} parent=47 // pred_check
          %p313 = pneg %p312
        $region54: #{tpu_custom_call.1} parent=47 // pred_check_branch
          %315 = sbr.rel (%p313) target = $region56
        $region55: #{tpu_custom_call.1} parent=47 // pred_region
          %316 = vst [vmem:[#allocation2] sm:$0xff] 0.0
          %317 = vst [vmem:[#allocation2 + $0x8] sm:$0xff] 0.0
          %318 = vst [vmem:[#allocation2 + $0x10] sm:$0xff] 0.0
          %319 = vst [vmem:[#allocation2 + $0x18] sm:$0xff] 0.0
          %320 = vst [vmem:[#allocation2 + $0x20] sm:$0xff] 0.0
          %321 = vst [vmem:[#allocation2 + $0x28] sm:$0xff] 0.0
          %322 = vst [vmem:[#allocation2 + $0x30] sm:$0xff] 0.0
          %323 = vst [vmem:[#allocation2 + $0x38] sm:$0xff] 0.0
        $region56: #{tpu_custom_call.1} parent=47 // pred_fallthru
          _
        %p324 = scmp.ne.s32.totalorder %s28, 1
        // Predicated region
        $region57: #{tpu_custom_call.1} parent=47 // pred_check
          %p325 = pneg %p324
        $region58: #{tpu_custom_call.1} parent=47 // pred_check_branch
          %327 = sbr.rel (%p325) target = $region60
        $region59: #{tpu_custom_call.1} parent=47 // pred_region
          %v328 = vld [vmem:[%s280] sm:$0xff]
          %v329 = vld [vmem:[%s280 + $0x8] sm:$0xff]
          %v330 = vld [vmem:[%s280 + $0x10] sm:$0xff]
          %v331 = vld [vmem:[%s280 + $0x18] sm:$0xff]
          %v332 = vld [vmem:[%s280 + $0x20] sm:$0xff]
          %v333 = vld [vmem:[%s280 + $0x28] sm:$0xff]
          %v334 = vld [vmem:[%s280 + $0x30] sm:$0xff]
          %v335 = vld [vmem:[%s280 + $0x38] sm:$0xff]
          %v336 = vld [vmem:[#allocation2] sm:$0xff]
          %v337 = vld [vmem:[#allocation2 + $0x8] sm:$0xff]
          %v338 = vld [vmem:[#allocation2 + $0x10] sm:$0xff]
          %v339 = vld [vmem:[#allocation2 + $0x18] sm:$0xff]
          %v340 = vld [vmem:[#allocation2 + $0x20] sm:$0xff]
          %v341 = vld [vmem:[#allocation2 + $0x28] sm:$0xff]
          %v342 = vld [vmem:[#allocation2 + $0x30] sm:$0xff]
          %v343 = vld [vmem:[#allocation2 + $0x38] sm:$0xff]
          %v344 = vadd.f32 %v336, %v328
          %v345 = vadd.f32 %v337, %v329
          %v346 = vadd.f32 %v338, %v330
          %v347 = vadd.f32 %v339, %v331
          %v348 = vadd.f32 %v340, %v332
          %v349 = vadd.f32 %v341, %v333
          %v350 = vadd.f32 %v342, %v334
          %v351 = vadd.f32 %v343, %v335
          %352 = vst [vmem:[#allocation2] sm:$0xff] %v344
          %353 = vst [vmem:[#allocation2 + $0x8] sm:$0xff] %v345
          %354 = vst [vmem:[#allocation2 + $0x10] sm:$0xff] %v346
          %355 = vst [vmem:[#allocation2 + $0x18] sm:$0xff] %v347
          %356 = vst [vmem:[#allocation2 + $0x20] sm:$0xff] %v348
          %357 = vst [vmem:[#allocation2 + $0x28] sm:$0xff] %v349
          %358 = vst [vmem:[#allocation2 + $0x30] sm:$0xff] %v350
          %359 = vst [vmem:[#allocation2 + $0x38] sm:$0xff] %v351
        $region60: #{tpu_custom_call.1} parent=47 // pred_fallthru
          _
        %p360 = scmp.eq.s32.totalorder %s28, 1
        // Predicated region
        $region61: #{tpu_custom_call.1} parent=47 // pred_check
          %p361 = pneg %p360
        $region62: #{tpu_custom_call.1} parent=47 // pred_check_branch
          %363 = sbr.rel (%p361) target = $region64
        $region63: #{tpu_custom_call.1} parent=47 // pred_region
          %v364 = vld [vmem:[%s280] sm:$0xff]
          %v365 = vld [vmem:[%s280 + $0x8] sm:$0xff]
          %v366 = vld [vmem:[%s280 + $0x10] sm:$0xff]
          %v367 = vld [vmem:[%s280 + $0x18] sm:$0xff]
          %v368 = vld [vmem:[%s280 + $0x20] sm:$0xff]
          %v369 = vld [vmem:[%s280 + $0x28] sm:$0xff]
          %v370 = vld [vmem:[%s280 + $0x30] sm:$0xff]
          %v371 = vld [vmem:[%s280 + $0x38] sm:$0xff]
          %s372 = smul.u32 %s28, 128
          %s373 = ssub.s32 192, %s372
          %v374 = vlaneseq
          %v375 = vand.u32 %v374, 127
          %v376 = vstv %s373
          %vm377 = vcmp.lt.s32.totalorder %v375, %v376
          %v378 = vsel %vm377, %v364, 0.0
          %v379 = vsel %vm377, %v365, 0.0
          %v380 = vsel %vm377, %v366, 0.0
          %v381 = vsel %vm377, %v367, 0.0
          %v382 = vsel %vm377, %v368, 0.0
          %v383 = vsel %vm377, %v369, 0.0
          %v384 = vsel %vm377, %v370, 0.0
          %v385 = vsel %vm377, %v371, 0.0
          %v386 = vld [vmem:[#allocation2] sm:$0xff]
          %v387 = vld [vmem:[#allocation2 + $0x8] sm:$0xff]
          %v388 = vld [vmem:[#allocation2 + $0x10] sm:$0xff]
          %v389 = vld [vmem:[#allocation2 + $0x18] sm:$0xff]
          %v390 = vld [vmem:[#allocation2 + $0x20] sm:$0xff]
          %v391 = vld [vmem:[#allocation2 + $0x28] sm:$0xff]
          %v392 = vld [vmem:[#allocation2 + $0x30] sm:$0xff]
          %v393 = vld [vmem:[#allocation2 + $0x38] sm:$0xff]
          %v394 = vadd.f32 %v386, %v378
          %v395 = vadd.f32 %v387, %v379
          %v396 = vadd.f32 %v388, %v380
          %v397 = vadd.f32 %v389, %v381
          %v398 = vadd.f32 %v390, %v382
          %v399 = vadd.f32 %v391, %v383
          %v400 = vadd.f32 %v392, %v384
          %v401 = vadd.f32 %v393, %v385
          %402 = vst [vmem:[#allocation2] sm:$0xff] %v394
          %403 = vst [vmem:[#allocation2 + $0x8] sm:$0xff] %v395
          %404 = vst [vmem:[#allocation2 + $0x10] sm:$0xff] %v396
          %405 = vst [vmem:[#allocation2 + $0x18] sm:$0xff] %v397
          %406 = vst [vmem:[#allocation2 + $0x20] sm:$0xff] %v398
          %407 = vst [vmem:[#allocation2 + $0x28] sm:$0xff] %v399
          %408 = vst [vmem:[#allocation2 + $0x30] sm:$0xff] %v400
          %409 = vst [vmem:[#allocation2 + $0x38] sm:$0xff] %v401
          %v410 = vld [vmem:[#allocation2] sm:$0xff]
          %v411 = vld [vmem:[#allocation2 + $0x8] sm:$0xff]
          %v412 = vld [vmem:[#allocation2 + $0x10] sm:$0xff]
          %v413 = vld [vmem:[#allocation2 + $0x18] sm:$0xff]
          %v414 = vld [vmem:[#allocation2 + $0x20] sm:$0xff]
          %v415 = vld [vmem:[#allocation2 + $0x28] sm:$0xff]
          %v416 = vld [vmem:[#allocation2 + $0x30] sm:$0xff]
          %v417 = vld [vmem:[#allocation2 + $0x38] sm:$0xff]
          %418 = vadd.xlane.f32.xlu0 %v410
          %v419 = vpop.xlane.xlu0 %418
          %420 = vadd.xlane.f32.xlu0 %v411
          %v421 = vpop.xlane.xlu0 %420
          %422 = vadd.xlane.f32.xlu0 %v412
          %v423 = vpop.xlane.xlu0 %422
          %424 = vadd.xlane.f32.xlu0 %v413
          %v425 = vpop.xlane.xlu0 %424
          %426 = vadd.xlane.f32.xlu0 %v414
          %v427 = vpop.xlane.xlu0 %426
          %428 = vadd.xlane.f32.xlu0 %v415
          %v429 = vpop.xlane.xlu0 %428
          %430 = vadd.xlane.f32.xlu0 %v416
          %v431 = vpop.xlane.xlu0 %430
          %432 = vadd.xlane.f32.xlu0 %v417
          %v433 = vpop.xlane.xlu0 %432
          %v434 = vmul.f32 %v419, 0.0052083335
          %v435 = vmul.f32 %v421, 0.0052083335
          %v436 = vmul.f32 %v423, 0.0052083335
          %v437 = vmul.f32 %v425, 0.0052083335
          %v438 = vmul.f32 %v427, 0.0052083335
          %v439 = vmul.f32 %v429, 0.0052083335
          %v440 = vmul.f32 %v431, 0.0052083335
          %v441 = vmul.f32 %v433, 0.0052083335
          %v442 = vld [vmem:[%s1] sm:$0xff]
          %v443 = vld [vmem:[%s1 + $0x8] sm:$0xff]
          %v444 = vld [vmem:[%s1 + $0x10] sm:$0xff]
          %v445 = vld [vmem:[%s1 + $0x18] sm:$0xff]
          %v446 = vld [vmem:[%s1 + $0x20] sm:$0xff]
          %v447 = vld [vmem:[%s1 + $0x28] sm:$0xff]
          %v448 = vld [vmem:[%s1 + $0x30] sm:$0xff]
          %v449 = vld [vmem:[%s1 + $0x38] sm:$0xff]
          %v450 = vld [vmem:[%s2] sm:$0x1]
          %v459 = vlaneseq
          %v460 = vshrl.u32 %v459, 7
          %v461 = vsub.s32 %v375, %v460
          %v462 = vrot.slane %v434, %v461
          %v463 = vadd.s32 %v375, 4294967288
          %v464 = vlaneseq
          %v465 = vshrl.u32 %v464, 7
          %v466 = vsub.s32 %v463, %v465
          %v467 = vrot.slane %v435, %v466
          %vm468 = vcmask 130112
          %v469 = vsel %vm468, %v467, %v462
          %v470 = vadd.s32 %v375, 4294967280
          %v471 = vlaneseq
          %v472 = vshrl.u32 %v471, 7
          %v473 = vsub.s32 %v470, %v472
          %v474 = vrot.slane %v436, %v473
          %vm475 = vcmask 195712
          %v476 = vsel %vm475, %v474, %v469
          %v477 = vadd.s32 %v375, 4294967272
          %v478 = vlaneseq
          %v479 = vshrl.u32 %v478, 7
          %v480 = vsub.s32 %v477, %v479
          %v481 = vrot.slane %v437, %v480
          %vm482 = vcmask 261312
          %v483 = vsel %vm482, %v481, %v476
          %v484 = vadd.s32 %v375, 4294967264
          %v485 = vlaneseq
          %v486 = vshrl.u32 %v485, 7
          %v487 = vsub.s32 %v484, %v486
          %v488 = vrot.slane %v438, %v487
          %vm489 = vcmask 326912
          %v490 = vsel %vm489, %v488, %v483
          %v491 = vadd.s32 %v375, 4294967256
          %v492 = vlaneseq
          %v493 = vshrl.u32 %v492, 7
          %v494 = vsub.s32 %v491, %v493
          %v495 = vrot.slane %v439, %v494
          %vm496 = vcmask 392512
          %v497 = vsel %vm496, %v495, %v490
          %v498 = vadd.s32 %v375, 4294967248
          %v499 = vlaneseq
          %v500 = vshrl.u32 %v499, 7
          %v501 = vsub.s32 %v498, %v500
          %v502 = vrot.slane %v440, %v501
          %vm503 = vcmask 458112
          %v504 = vsel %vm503, %v502, %v497
          %v505 = vadd.s32 %v375, 4294967240
          %v506 = vlaneseq
          %v507 = vshrl.u32 %v506, 7
          %v508 = vsub.s32 %v505, %v507
          %v509 = vrot.slane %v441, %v508
          %vm510 = vcmask 523712
          %v511 = vsel %vm510, %v509, %v504
          %vm512 = vcmask 523264
          %v513 = vsel %vm512, %v511, 0
          %515 = vmatprep.subr.mxu0 0.0
          %516 = vmatpush1.msra.mxu0 %v442
          %517 = vmatprep.subr.mxu0 0.0
          %518 = vmatpush1.msra.mxu0 %v443
          %519 = vmatprep.subr.mxu0 0.0
          %520 = vmatpush1.msra.mxu0 %v444
          %521 = vmatprep.subr.mxu0 0.0
          %522 = vmatpush1.msra.mxu0 %v445
          %523 = vmatprep.subr.mxu0 0.0
          %524 = vmatpush1.msra.mxu0 %v446
          %525 = vmatprep.subr.mxu0 0.0
          %526 = vmatpush1.msra.mxu0 %v447
          %527 = vmatprep.subr.mxu0 0.0
          %528 = vmatpush1.msra.mxu0 %v448
          %529 = vmatprep.subr.mxu0 0.0
          %530 = vmatpush1.msra.mxu0 %v449
          %531 = vmatprep.subr.mxu0 0.0
          %532 = vmatpush1.msra.mxu0 0.0
          %533 = vmatprep.subr.mxu0 0.0
          %534 = vmatpush1.msra.mxu0 0.0
          %535 = vmatprep.subr.mxu0 0.0
          %536 = vmatpush1.msra.mxu0 0.0
          %537 = vmatprep.subr.mxu0 0.0
          %538 = vmatpush1.msra.mxu0 0.0
          %539 = vmatprep.subr.mxu0 0.0
          %540 = vmatpush1.msra.mxu0 0.0
          %541 = vmatprep.subr.mxu0 0.0
          %542 = vmatpush1.msra.mxu0 0.0
          %543 = vmatprep.subr.mxu0 0.0
          %544 = vmatpush1.msra.mxu0 0.0
          %545 = vmatprep.subr.mxu0 0.0
          %546 = vmatpush1.msra.mxu0 0.0
          %547 = vmatprep.subr.mxu0 0.0
          %548 = vmatpush1.msra.mxu0 0.0
          %549 = vmatprep.subr.mxu0 0.0
          %550 = vmatpush1.msra.mxu0 0.0
          %551 = vmatprep.subr.mxu0 0.0
          %552 = vmatpush1.msra.mxu0 0.0
          %553 = vmatprep.subr.mxu0 0.0
          %554 = vmatpush1.msra.mxu0 0.0
          %555 = vmatprep.subr.mxu0 0.0
          %556 = vmatpush1.msra.mxu0 0.0
          %557 = vmatprep.subr.mxu0 0.0
          %558 = vmatpush1.msra.mxu0 0.0
          %559 = vmatprep.subr.mxu0 0.0
          %560 = vmatpush1.msra.mxu0 0.0
          %561 = vmatprep.subr.mxu0 0.0
          %562 = vmatpush1.msra.mxu0 0.0
          %563 = vmatprep.subr.mxu0 0.0
          %564 = vmatpush1.msra.mxu0 0.0
          %565 = vmatprep.subr.mxu0 0.0
          %566 = vmatpush1.msra.mxu0 0.0
          %567 = vmatprep.subr.mxu0 0.0
          %568 = vmatpush1.msra.mxu0 0.0
          %569 = vmatprep.subr.mxu0 0.0
          %570 = vmatpush1.msra.mxu0 0.0
          %571 = vmatprep.subr.mxu0 0.0
          %572 = vmatpush1.msra.mxu0 0.0
          %573 = vmatprep.subr.mxu0 0.0
          %574 = vmatpush1.msra.mxu0 0.0
          %575 = vmatprep.subr.mxu0 0.0
          %576 = vmatpush1.msra.mxu0 0.0
          %577 = vmatprep.subr.mxu0 0.0
          %578 = vmatpush1.msra.mxu0 0.0
          %579 = vmatprep.mubr.f32.mxu0 0.0
          %580 = vmatmul.mubr.f32.gmra.mrb[0].mxu0 %v513
          %v581 = vpop.f32.mrb[0].mxu0
          %v582 = vadd.f32 %v450, %v581
          %v583 = vpop.f32.mrb[0].mxu0
          %584 = vdwg.mxu0
          %v585 = vmax.f32 %v582, 0.0
          %v586 = vld [vmem:[%s3] sm:$0xff]
          %v587 = vld [vmem:[%s3 + $0x8] sm:$0xff]
          %v588 = vld [vmem:[%s3 + $0x10] sm:$0xff]
          %v589 = vld [vmem:[%s3 + $0x18] sm:$0xff]
          %v590 = vld [vmem:[%s3 + $0x20] sm:$0xff]
          %v591 = vld [vmem:[%s3 + $0x28] sm:$0xff]
          %v592 = vld [vmem:[%s3 + $0x30] sm:$0xff]
          %v593 = vld [vmem:[%s3 + $0x38] sm:$0xff]
          %v594 = vld [vmem:[%s3 + $0x40] sm:$0xff]
          %v595 = vld [vmem:[%s3 + $0x48] sm:$0xff]
          %v596 = vld [vmem:[%s3 + $0x50] sm:$0xff]
          %v597 = vld [vmem:[%s3 + $0x58] sm:$0xff]
          %v598 = vld [vmem:[%s3 + $0x60] sm:$0xff]
          %v599 = vld [vmem:[%s3 + $0x68] sm:$0xff]
          %v600 = vld [vmem:[%s3 + $0x70] sm:$0xff]
          %v601 = vld [vmem:[%s3 + $0x78] sm:$0xff]
          %v602 = vld [vmem:[%s4] sm:$0x1]
          %603 = vmatprep.subr.mxu0 0.0
          %604 = vmatpush1.msra.mxu0 %v586
          %605 = vmatprep.subr.mxu0 0.0
          %606 = vmatpush1.msra.mxu0 %v587
          %607 = vmatprep.subr.mxu0 0.0
          %608 = vmatpush1.msra.mxu0 %v588
          %609 = vmatprep.subr.mxu0 0.0
          %610 = vmatpush1.msra.mxu0 %v589
          %611 = vmatprep.subr.mxu0 0.0
          %612 = vmatpush1.msra.mxu0 %v590
          %613 = vmatprep.subr.mxu0 0.0
          %614 = vmatpush1.msra.mxu0 %v591
          %615 = vmatprep.subr.mxu0 0.0
          %616 = vmatpush1.msra.mxu0 %v592
          %617 = vmatprep.subr.mxu0 0.0
          %618 = vmatpush1.msra.mxu0 %v593
          %619 = vmatprep.subr.mxu0 0.0
          %620 = vmatpush1.msra.mxu0 %v594
          %621 = vmatprep.subr.mxu0 0.0
          %622 = vmatpush1.msra.mxu0 %v595
          %623 = vmatprep.subr.mxu0 0.0
          %624 = vmatpush1.msra.mxu0 %v596
          %625 = vmatprep.subr.mxu0 0.0
          %626 = vmatpush1.msra.mxu0 %v597
          %627 = vmatprep.subr.mxu0 0.0
          %628 = vmatpush1.msra.mxu0 %v598
          %629 = vmatprep.subr.mxu0 0.0
          %630 = vmatpush1.msra.mxu0 %v599
          %631 = vmatprep.subr.mxu0 0.0
          %632 = vmatpush1.msra.mxu0 %v600
          %633 = vmatprep.subr.mxu0 0.0
          %634 = vmatpush1.msra.mxu0 %v601
          %635 = vmatprep.subr.mxu0 0.0
          %636 = vmatpush1.msra.mxu0 0.0
          %637 = vmatprep.subr.mxu0 0.0
          %638 = vmatpush1.msra.mxu0 0.0
          %639 = vmatprep.subr.mxu0 0.0
          %640 = vmatpush1.msra.mxu0 0.0
          %641 = vmatprep.subr.mxu0 0.0
          %642 = vmatpush1.msra.mxu0 0.0
          %643 = vmatprep.subr.mxu0 0.0
          %644 = vmatpush1.msra.mxu0 0.0
          %645 = vmatprep.subr.mxu0 0.0
          %646 = vmatpush1.msra.mxu0 0.0
          %647 = vmatprep.subr.mxu0 0.0
          %648 = vmatpush1.msra.mxu0 0.0
          %649 = vmatprep.subr.mxu0 0.0
          %650 = vmatpush1.msra.mxu0 0.0
          %651 = vmatprep.subr.mxu0 0.0
          %652 = vmatpush1.msra.mxu0 0.0
          %653 = vmatprep.subr.mxu0 0.0
          %654 = vmatpush1.msra.mxu0 0.0
          %655 = vmatprep.subr.mxu0 0.0
          %656 = vmatpush1.msra.mxu0 0.0
          %657 = vmatprep.subr.mxu0 0.0
          %658 = vmatpush1.msra.mxu0 0.0
          %659 = vmatprep.subr.mxu0 0.0
          %660 = vmatpush1.msra.mxu0 0.0
          %661 = vmatprep.subr.mxu0 0.0
          %662 = vmatpush1.msra.mxu0 0.0
          %663 = vmatprep.subr.mxu0 0.0
          %664 = vmatpush1.msra.mxu0 0.0
          %665 = vmatprep.subr.mxu0 0.0
          %666 = vmatpush1.msra.mxu0 0.0
          %667 = vmatprep.mubr.f32.mxu0 0.0
          %668 = vmatmul.mubr.f32.gmra.mrb[0].mxu0 %v585
          %v669 = vpop.f32.mrb[0].mxu0
          %v670 = vadd.f32 %v602, %v669
          %v671 = vpop.f32.mrb[0].mxu0
          %672 = vdwg.mxu0
          %v673 = vmax.f32 %v670, 0.0
          %v674 = vld [vmem:[%s5] sm:$0x1]
          %v675 = vmul.f32 %v673, %v674
          %vm676 = vcmask 516096
          %v677 = vsel %vm676, %v675, 0.0
          %678 = vadd.xlane.f32.xlu0 %v677
          %v679 = vpop.xlane.xlu0 %678
          %v680 = vld [vmem:[#allocation3] sm:$0x1]
          %v681 = vadd.f32 %v679, %v680
          %v682 = vxor.u32 %v681, 2147483648
          %v683 = vmul.f32 %v682, 1.442695
          %v684 = vpow.pop %v683
          %v685 = vadd.f32 %v684, 1.0
          %v686 = vrcp.pop %v685
          %v687 = vmul.f32 1.0, %v686
          %v688 = vmul.f32 %v687, 1024.0
          %v689 = vround.ne.pseudo %v688
          %v690 = vmax.f32 %v689, 30.0
          %v691 = vcvt.f32.s32.to.zero.pseudo %v690
          %vm692 = vcmask 0
          %693 = vst.msk [vmem:[%s311] sm:$0x1] %vm692, %v691
        $region64: #{tpu_custom_call.1} parent=47 // pred_fallthru
          _
        %p694 = scmp.lt.s32.totalorder %s27, 1
        %s695 = scalar_select %p694, %s27, 1
        %s696 = scalar_lea.vmem %s7, %s695
        // Predicated region
        $region65: #{tpu_custom_call.1} parent=47 // pred_check
          %p697 = pneg %p207
        $region66: #{tpu_custom_call.1} parent=47 // pred_check_branch
          %699 = sbr.rel (%p697) target = $region68
        $region67: #{tpu_custom_call.1} parent=47 // pred_region
          _
        $region68: #{tpu_custom_call.1} parent=47 // pred_fallthru
          _
      $region48: #{tpu_custom_call.1} parent=5 // pred_fallthru
        _
      %p700 = scmp.le.s32.totalorder 2, %s18
      // Predicated region
      $region69: #{tpu_custom_call.1} parent=5 // pred_check
        %p701 = pneg %p700
      $region70: #{tpu_custom_call.1} parent=5 // pred_check_branch
        %703 = sbr.rel (%p701) target = $region72
      $region71: #{tpu_custom_call.1} parent=5 // pred_region
        %s704 = ssub.s32 %s18, 2
        // Predicated region
        $region73: #{tpu_custom_call.1} parent=71 // pred_check
          %p705 = pneg %p213
        $region74: #{tpu_custom_call.1} parent=71 // pred_check_branch
          %707 = sbr.rel (%p705) target = $region76
        $region75: #{tpu_custom_call.1} parent=71 // pred_region
          %p708 = scmp.lt.s32.totalorder %s29, 1
          %s709 = scalar_select %p708, %s29, 1
          %s710 = scalar_lea.vmem %s7, %s709
        $region76: #{tpu_custom_call.1} parent=71 // pred_fallthru
          _
      $region72: #{tpu_custom_call.1} parent=5 // pred_fallthru
        _
    $region6: #{tpu_custom_call.1} parent=1 // loop_footer
      %s22 = sadd.s32 1, %s18
    $region7: #{tpu_custom_call.1} parent=1 // loop_footer_branch
      %17 = sbr.rel target = $region3
    $region8: #{tpu_custom_call.1} parent=1 // loop_exit
      _
    %711 = vsyncpa [#allocation5], 1
    %s712 = scalar_lea.sflag [#allocation5], 1
    %713 = vsyncpa %s712, 1

</llo_original>
